<compile_context>
chip_gen: v7x
topology: tpu7x:2x2x1
jax: 0.10.0
libtpu: 0.0.40
codegen_flags: <defaults>
</compile_context>

<pallas_src>
import jax
import jax.numpy as jnp
from jax.experimental import pallas as pl
from jax.experimental.pallas import tpu as pltpu

LANE = 128      # vreg lane width / MXU-native last dim
SUBLANE = 8     # vreg sublane width (second-to-last dim granularity)


def _round_up(n, m):
    return (n + m - 1) // m * m


# ----------------------------------------------------------------------------
# Kernel: whole 4-layer MLP on one lane-dense batch tile.
# ----------------------------------------------------------------------------
def mlp_kernel(x_ref, w1_ref, b1_ref, w2_ref, b2_ref,
               w3_ref, b3_ref, w4_ref, b4_ref, o_ref):
    x = x_ref[...]

    h = jnp.dot(x, w1_ref[...], preferred_element_type=jnp.float32) + b1_ref[...]
    h = jax.nn.sigmoid(h)

    h = jnp.dot(h, w2_ref[...], preferred_element_type=jnp.float32) + b2_ref[...]
    h = jax.nn.sigmoid(h)

    h = jnp.dot(h, w3_ref[...], preferred_element_type=jnp.float32) + b3_ref[...]
    h = jax.nn.sigmoid(h)

    out = jnp.dot(h, w4_ref[...], preferred_element_type=jnp.float32) + b4_ref[...]
    o_ref[...] = out.astype(o_ref.dtype)


# ----------------------------------------------------------------------------
# Parameter prep: store weights as [in, out] (transposed vs. PyTorch) and
# zero-pad every feature dim to the 128-lane boundary.  Padding is done ONCE,
# outside the hot path.
# ----------------------------------------------------------------------------
def _pad2d(a, rows, cols):
    r, c = a.shape
    return jnp.pad(a, ((0, rows - r), (0, cols - c)))


def pad_params(params):
    """Pad (w:[in,out], b:[1,out]) pairs to lane-aligned shapes with zeros."""
    padded = []
    for w, b in params:
        fi, fo = w.shape
        fi_p, fo_p = _round_up(fi, LANE), _round_up(fo, LANE)
        padded.append((_pad2d(w, fi_p, fo_p), _pad2d(b, 1, fo_p)))
    return tuple(padded)


# ----------------------------------------------------------------------------
# Wrapper: batch-tiled, lane-dense pallas_call.
# ----------------------------------------------------------------------------
def net_forward(x, padded_params, out_dim=50, batch_tile=256):
    (w1, b1), (w2, b2), (w3, b3), (w4, b4) = padded_params
    batch, in_dim = x.shape
    in_pad = w1.shape[0]
    out_pad = w4.shape[1]

    # Batch tile: multiple of the sublane width; don't exceed (rounded) batch.
    tb = min(_round_up(batch_tile, SUBLANE), _round_up(batch, SUBLANE))
    batch_pad = _round_up(batch, tb)

    # Zero-pad activations (lanes + batch remainder).  Padded rows are sliced
    # off after the call; padded input lanes hit zero weight rows -> no effect.
    x_p = jnp.pad(x, ((0, batch_pad - batch), (0, in_pad - in_dim)))

    grid = (batch_pad // tb,)

    def row_spec(shape):      # streamed along the batch grid axis
        return pl.BlockSpec(shape, lambda i: (i, 0))

    def pinned_spec(shape):   # weights/biases: same block every step (resident)
        return pl.BlockSpec(shape, lambda i: (0, 0))

    out_padded = pl.pallas_call(
        mlp_kernel,
        out_shape=jax.ShapeDtypeStruct((batch_pad, out_pad), jnp.float32),
        grid=grid,
        in_specs=[
            row_spec((tb, in_pad)),
            pinned_spec(w1.shape), pinned_spec(b1.shape),
            pinned_spec(w2.shape), pinned_spec(b2.shape),
            pinned_spec(w3.shape), pinned_spec(b3.shape),
            pinned_spec(w4.shape), pinned_spec(b4.shape),
        ],
        out_specs=row_spec((tb, out_pad)),
        compiler_params=pltpu.CompilerParams(
            dimension_semantics=("parallel",)),
    )(x_p, w1, b1, w2, b2, w3, b3, w4, b4)

    return out_padded[:batch, :out_dim]


# ----------------------------------------------------------------------------
# Init (mimics PyTorch's default U(-1/sqrt(fan_in), +1/sqrt(fan_in))).
# ----------------------------------------------------------------------------
def init_linear(key, fan_in, fan_out):
    kw, kb = jax.random.split(key)
    bound = 1.0 / jnp.sqrt(jnp.float32(fan_in))
    w = jax.random.uniform(kw, (fan_in, fan_out), jnp.float32, -bound, bound)
    b = jax.random.uniform(kb, (1, fan_out), jnp.float32, -bound, bound)
    return w, b


def init_net_params(key, input_size, units=25, final_out=50):
    k1, k2, k3, k4 = jax.random.split(key, 4)
    return (
        init_linear(k1, input_size, units),
        init_linear(k2, units, units),
        init_linear(k3, units, units),
        init_linear(k4, units, final_out),
    )


def reference_forward(x, params):
    (w1, b1), (w2, b2), (w3, b3), (w4, b4) = params
    h = jax.nn.sigmoid(x @ w1 + b1)
    h = jax.nn.sigmoid(h @ w2 + b2)
    h = jax.nn.sigmoid(h @ w3 + b3)
    return h @ w4 + b4


if __name__ == "__main__":
    key = jax.random.PRNGKey(0)
    k_params, k_x1, k_x2 = jax.random.split(key, 3)

    input_size = 32
    units = 25
    out_dim = 50

    params = init_net_params(k_params, input_size, units, out_dim)
    padded_params = pad_params(params)

    # Case 1: tiny batch (single grid step).
    batch = 8
    x = jax.random.normal(k_x1, (batch, input_size), jnp.float32)
    out = jax.block_until_ready(net_forward(x, padded_params, out_dim))
    ref = reference_forward(x, params)
    assert out.shape == (batch, out_dim), out.shape
    assert jnp.allclose(out, ref, atol=1e-5, rtol=1e-5), "mismatch vs reference (batch=8)"

    # Case 2: multi-step batch grid with a remainder (exercises tiling path).
    batch2 = 40
    x2 = jax.random.normal(k_x2, (batch2, input_size), jnp.float32)
    out2 = jax.block_until_ready(net_forward(x2, padded_params, out_dim, batch_tile=16))
    ref2 = reference_forward(x2, params)
    assert out2.shape == (batch2, out_dim), out2.shape
    assert jnp.allclose(out2, ref2, atol=1e-5, rtol=1e-5), "mismatch vs reference (batch=40)"

    print("KERNEL_OK")
</pallas_src>

<mosaic_0001>
module attributes {stable_mosaic.version = 11 : i64} {
  func.func @mlp_kernel(%arg0: i32, %arg1: memref<8x128xf32, #tpu.memory_space<vmem>>, %arg2: memref<128x128xf32, #tpu.memory_space<vmem>>, %arg3: memref<1x128xf32, #tpu.memory_space<vmem>>, %arg4: memref<128x128xf32, #tpu.memory_space<vmem>>, %arg5: memref<1x128xf32, #tpu.memory_space<vmem>>, %arg6: memref<128x128xf32, #tpu.memory_space<vmem>>, %arg7: memref<1x128xf32, #tpu.memory_space<vmem>>, %arg8: memref<128x128xf32, #tpu.memory_space<vmem>>, %arg9: memref<1x128xf32, #tpu.memory_space<vmem>>, %arg10: memref<8x128xf32, #tpu.memory_space<vmem>>) attributes {dimension_semantics = [#tpu.dimension_semantics<parallel>], iteration_bounds = array<i64: 1>, scalar_prefetch = 0 : i64, scratch_operands = 0 : i64, tpu.core_type = #tpu.core_type<tc>, window_params = [{transform_indices = @transform_0, window_bounds = array<i64: 8, 128>}, {pipeline_mode = #tpu.pipeline_mode<synchronous>, transform_indices = @transform_1, window_bounds = array<i64: 128, 128>}, {pipeline_mode = #tpu.pipeline_mode<synchronous>, transform_indices = @transform_2, window_bounds = array<i64: 1, 128>}, {pipeline_mode = #tpu.pipeline_mode<synchronous>, transform_indices = @transform_3, window_bounds = array<i64: 128, 128>}, {pipeline_mode = #tpu.pipeline_mode<synchronous>, transform_indices = @transform_4, window_bounds = array<i64: 1, 128>}, {pipeline_mode = #tpu.pipeline_mode<synchronous>, transform_indices = @transform_5, window_bounds = array<i64: 128, 128>}, {pipeline_mode = #tpu.pipeline_mode<synchronous>, transform_indices = @transform_6, window_bounds = array<i64: 1, 128>}, {pipeline_mode = #tpu.pipeline_mode<synchronous>, transform_indices = @transform_7, window_bounds = array<i64: 128, 128>}, {pipeline_mode = #tpu.pipeline_mode<synchronous>, transform_indices = @transform_8, window_bounds = array<i64: 1, 128>}, {transform_indices = @transform_9, window_bounds = array<i64: 8, 128>}]} {
    %c0 = arith.constant 0 : index
    %c0_0 = arith.constant 0 : index
    %0 = vector.load %arg1[%c0, %c0_0] : memref<8x128xf32, #tpu.memory_space<vmem>>, vector<8x128xf32>
    %c0_1 = arith.constant 0 : index
    %c0_2 = arith.constant 0 : index
    %1 = vector.load %arg2[%c0_1, %c0_2] : memref<128x128xf32, #tpu.memory_space<vmem>>, vector<128x128xf32>
    %cst = arith.constant dense<0.000000e+00> : vector<8x128xf32>
    %2 = tpu.matmul %0, %1, %cst {dimension_numbers = #tpu.dot_dimension_numbers<[1], [0], [0], [1], [0, 0, 1, 1], [], []>} : vector<8x128xf32>, vector<128x128xf32>, vector<8x128xf32> -> vector<8x128xf32>
    %c0_3 = arith.constant 0 : index
    %c0_4 = arith.constant 0 : index
    %3 = vector.load %arg3[%c0_3, %c0_4] : memref<1x128xf32, #tpu.memory_space<vmem>>, vector<1x128xf32>
    %4 = vector.broadcast %3 : vector<1x128xf32> to vector<8x128xf32>
    %5 = arith.addf %2, %4 : vector<8x128xf32>
    %6 = arith.negf %5 : vector<8x128xf32>
    %7 = math.exp %6 : vector<8x128xf32>
    %cst_5 = arith.constant 1.000000e+00 : f32
    %8 = vector.broadcast %cst_5 : f32 to vector<8x128xf32>
    %9 = arith.addf %8, %7 : vector<8x128xf32>
    %10 = arith.divf %8, %9 : vector<8x128xf32>
    %c0_6 = arith.constant 0 : index
    %c0_7 = arith.constant 0 : index
    %11 = vector.load %arg4[%c0_6, %c0_7] : memref<128x128xf32, #tpu.memory_space<vmem>>, vector<128x128xf32>
    %cst_8 = arith.constant dense<0.000000e+00> : vector<8x128xf32>
    %12 = tpu.matmul %10, %11, %cst_8 {dimension_numbers = #tpu.dot_dimension_numbers<[1], [0], [0], [1], [0, 0, 1, 1], [], []>} : vector<8x128xf32>, vector<128x128xf32>, vector<8x128xf32> -> vector<8x128xf32>
    %c0_9 = arith.constant 0 : index
    %c0_10 = arith.constant 0 : index
    %13 = vector.load %arg5[%c0_9, %c0_10] : memref<1x128xf32, #tpu.memory_space<vmem>>, vector<1x128xf32>
    %14 = vector.broadcast %13 : vector<1x128xf32> to vector<8x128xf32>
    %15 = arith.addf %12, %14 : vector<8x128xf32>
    %16 = arith.negf %15 : vector<8x128xf32>
    %17 = math.exp %16 : vector<8x128xf32>
    %cst_11 = arith.constant 1.000000e+00 : f32
    %18 = vector.broadcast %cst_11 : f32 to vector<8x128xf32>
    %19 = arith.addf %18, %17 : vector<8x128xf32>
    %20 = arith.divf %18, %19 : vector<8x128xf32>
    %c0_12 = arith.constant 0 : index
    %c0_13 = arith.constant 0 : index
    %21 = vector.load %arg6[%c0_12, %c0_13] : memref<128x128xf32, #tpu.memory_space<vmem>>, vector<128x128xf32>
    %cst_14 = arith.constant dense<0.000000e+00> : vector<8x128xf32>
    %22 = tpu.matmul %20, %21, %cst_14 {dimension_numbers = #tpu.dot_dimension_numbers<[1], [0], [0], [1], [0, 0, 1, 1], [], []>} : vector<8x128xf32>, vector<128x128xf32>, vector<8x128xf32> -> vector<8x128xf32>
    %c0_15 = arith.constant 0 : index
    %c0_16 = arith.constant 0 : index
    %23 = vector.load %arg7[%c0_15, %c0_16] : memref<1x128xf32, #tpu.memory_space<vmem>>, vector<1x128xf32>
    %24 = vector.broadcast %23 : vector<1x128xf32> to vector<8x128xf32>
    %25 = arith.addf %22, %24 : vector<8x128xf32>
    %26 = arith.negf %25 : vector<8x128xf32>
    %27 = math.exp %26 : vector<8x128xf32>
    %cst_17 = arith.constant 1.000000e+00 : f32
    %28 = vector.broadcast %cst_17 : f32 to vector<8x128xf32>
    %29 = arith.addf %28, %27 : vector<8x128xf32>
    %30 = arith.divf %28, %29 : vector<8x128xf32>
    %c0_18 = arith.constant 0 : index
    %c0_19 = arith.constant 0 : index
    %31 = vector.load %arg8[%c0_18, %c0_19] : memref<128x128xf32, #tpu.memory_space<vmem>>, vector<128x128xf32>
    %cst_20 = arith.constant dense<0.000000e+00> : vector<8x128xf32>
    %32 = tpu.matmul %30, %31, %cst_20 {dimension_numbers = #tpu.dot_dimension_numbers<[1], [0], [0], [1], [0, 0, 1, 1], [], []>} : vector<8x128xf32>, vector<128x128xf32>, vector<8x128xf32> -> vector<8x128xf32>
    %c0_21 = arith.constant 0 : index
    %c0_22 = arith.constant 0 : index
    %33 = vector.load %arg9[%c0_21, %c0_22] : memref<1x128xf32, #tpu.memory_space<vmem>>, vector<1x128xf32>
    %34 = vector.broadcast %33 : vector<1x128xf32> to vector<8x128xf32>
    %35 = arith.addf %32, %34 : vector<8x128xf32>
    %c0_23 = arith.constant 0 : index
    %c0_24 = arith.constant 0 : index
    %36 = vector.load %arg10[%c0_23, %c0_24] : memref<8x128xf32, #tpu.memory_space<vmem>>, vector<8x128xf32>
    tpu.vector_store %arg10[%c0_23, %c0_24], %35 {strides = array<i32>} : memref<8x128xf32, #tpu.memory_space<vmem>>, vector<8x128xf32>,
    return
  }
  func.func @transform_0(%arg0: i32) -> (i32, i32) {
    %c0_i32 = arith.constant 0 : i32
    %c0_i32_0 = arith.constant 0 : i32
    return %arg0, %c0_i32 : i32, i32
  }
  func.func @transform_1(%arg0: i32) -> (i32, i32) {
    %c0_i32 = arith.constant 0 : i32
    %c0_i32_0 = arith.constant 0 : i32
    %c0_i32_1 = arith.constant 0 : i32
    return %c0_i32, %c0_i32_0 : i32, i32
  }
  func.func @transform_2(%arg0: i32) -> (i32, i32) {
    %c0_i32 = arith.constant 0 : i32
    %c0_i32_0 = arith.constant 0 : i32
    %c0_i32_1 = arith.constant 0 : i32
    return %c0_i32, %c0_i32_0 : i32, i32
  }
  func.func @transform_3(%arg0: i32) -> (i32, i32) {
    %c0_i32 = arith.constant 0 : i32
    %c0_i32_0 = arith.constant 0 : i32
    %c0_i32_1 = arith.constant 0 : i32
    return %c0_i32, %c0_i32_0 : i32, i32
  }
  func.func @transform_4(%arg0: i32) -> (i32, i32) {
    %c0_i32 = arith.constant 0 : i32
    %c0_i32_0 = arith.constant 0 : i32
    %c0_i32_1 = arith.constant 0 : i32
    return %c0_i32, %c0_i32_0 : i32, i32
  }
  func.func @transform_5(%arg0: i32) -> (i32, i32) {
    %c0_i32 = arith.constant 0 : i32
    %c0_i32_0 = arith.constant 0 : i32
    %c0_i32_1 = arith.constant 0 : i32
    return %c0_i32, %c0_i32_0 : i32, i32
  }
  func.func @transform_6(%arg0: i32) -> (i32, i32) {
    %c0_i32 = arith.constant 0 : i32
    %c0_i32_0 = arith.constant 0 : i32
    %c0_i32_1 = arith.constant 0 : i32
    return %c0_i32, %c0_i32_0 : i32, i32
  }
  func.func @transform_7(%arg0: i32) -> (i32, i32) {
    %c0_i32 = arith.constant 0 : i32
    %c0_i32_0 = arith.constant 0 : i32
    %c0_i32_1 = arith.constant 0 : i32
    return %c0_i32, %c0_i32_0 : i32, i32
  }
  func.func @transform_8(%arg0: i32) -> (i32, i32) {
    %c0_i32 = arith.constant 0 : i32
    %c0_i32_0 = arith.constant 0 : i32
    %c0_i32_1 = arith.constant 0 : i32
    return %c0_i32, %c0_i32_0 : i32, i32
  }
  func.func @transform_9(%arg0: i32) -> (i32, i32) {
    %c0_i32 = arith.constant 0 : i32
    %c0_i32_0 = arith.constant 0 : i32
    return %arg0, %c0_i32 : i32, i32
  }
}

</mosaic_0001>

<llo_original>
// kernel: tpu_custom_call.1
$region0: #{tpu_custom_call.1}
  #allocation0 [shape = 'u32[]', space=smem, size = 0x4, offset = 0x4, fixed_abs, tag = 'smem constant byte address 0x4 - core index']
  #allocation1 [shape = 'u32[144,128]{1,0:T(1,128)}', space=vmem, size = 0x12000, scoped, tag = 'internal scratch']
  %s0 = inlined_call_operand.hbm [shape: f32[8,128], index: 0, kind: input, shape index: {}]
  %s1 = inlined_call_operand.hbm [shape: f32[128,128], index: 1, kind: input, shape index: {}]
  %s2 = inlined_call_operand.vmem [shape: f32[1,128], index: 2, kind: input, shape index: {}]
  %s3 = inlined_call_operand.hbm [shape: f32[128,128], index: 3, kind: input, shape index: {}]
  %s4 = inlined_call_operand.vmem [shape: f32[1,128], index: 4, kind: input, shape index: {}]
  %s5 = inlined_call_operand.hbm [shape: f32[128,128], index: 5, kind: input, shape index: {}]
  %s6 = inlined_call_operand.vmem [shape: f32[1,128], index: 6, kind: input, shape index: {}]
  %s7 = inlined_call_operand.hbm [shape: f32[128,128], index: 7, kind: input, shape index: {}]
  %s8 = inlined_call_operand.vmem [shape: f32[1,128], index: 8, kind: input, shape index: {}]
  %s9 = inlined_call_operand.hbm [shape: f32[8,128], index: 9, kind: output, shape index: {}]
  %s10 = sld [smem:[#allocation0]]
  $region66: #{tpu_custom_call.1} parent=0
    _
  %s12 = ssub.s32 1, %s10
  %s13 = scalar_select 0, %s12, %s10
  $region1: #{tpu_custom_call.1} parent=0
    #allocation2 [shape = 'u8[4096]{0}', space=vmem, size = 0x1000, scoped, tag = 'input window, operand 0, single buffered']
    #allocation3 [shape = 's32[1]{0}', space=sflag, size = 0x4, scoped, tag = 'scoped memory for tpu_custom_call.1']
    #allocation4 [shape = 's32[1]{0}', space=sflag, size = 0x4, scoped, tag = 'scoped memory for tpu_custom_call.1']
    #allocation5 [shape = 'u8[65536]{0}', space=vmem, size = 0x10000, scoped, tag = 'input window, operand 1, single buffered']
    #allocation6 [shape = 's32[1]{0}', space=sflag, size = 0x4, scoped, tag = 'scoped memory for tpu_custom_call.1']
    #allocation7 [shape = 'u8[65536]{0}', space=vmem, size = 0x10000, scoped, tag = 'input window, operand 3, single buffered']
    #allocation8 [shape = 'u8[65536]{0}', space=vmem, size = 0x10000, scoped, tag = 'input window, operand 5, single buffered']
    #allocation9 [shape = 's32[1]{0}', space=sflag, size = 0x4, scoped, tag = 'scoped memory for tpu_custom_call.1']
    #allocation10 [shape = 'u8[65536]{0}', space=vmem, size = 0x10000, scoped, tag = 'input window, operand 7, single buffered']
    #allocation11 [shape = 'u8[4096]{0}', space=vmem, size = 0x1000, scoped, tag = 'output window, operand 0, single buffered']
    %14 = vsyncpa [#allocation3], 0
    %15 = vsyncpa [#allocation6], 0
    %16 = vsyncpa [#allocation9], 0
    %17 = vsyncpa [#allocation4], 0
    // Predicated region
    $region2: #{tpu_custom_call.1} parent=1 // pred_check
      _
    $region3: #{tpu_custom_call.1} parent=1 // pred_check_branch
      %19 = sbr.rel (0) target = $region5
    $region4: #{tpu_custom_call.1} parent=1 // pred_region
      %s21 = ssub.s32 128, 128
      %22 = vsyncadd [#allocation3], %s21
      %s24 = sshll.u32 [#allocation2], 4
      %s25 = int_to_ptr.vmem [resolvable:$true] %s24
      %27 = dma.hbm_to_vmem [thread:$0]  %s0, 128, %s25, [#allocation3]
    $region5: #{tpu_custom_call.1} parent=1 // pred_fallthru
      _
    // Predicated region
    $region6: #{tpu_custom_call.1} parent=1 // pred_check
      _
    $region7: #{tpu_custom_call.1} parent=1 // pred_check_branch
      %29 = sbr.rel (0) target = $region9
    $region8: #{tpu_custom_call.1} parent=1 // pred_region
      %s31 = ssub.s32 2048, 2048
      %32 = vsyncadd [#allocation6], %s31
      %s33 = sshll.u32 [#allocation5], 4
      %s34 = int_to_ptr.vmem [resolvable:$true] %s33
      %39 = dma.hbm_to_vmem [thread:$0]  %s1, 2048, %s34, [#allocation6], 128, 128, 8
    $region9: #{tpu_custom_call.1} parent=1 // pred_fallthru
      _
    // Predicated region
    $region10: #{tpu_custom_call.1} parent=1 // pred_check
      _
    $region11: #{tpu_custom_call.1} parent=1 // pred_check_branch
      %41 = sbr.rel (0) target = $region13
    $region12: #{tpu_custom_call.1} parent=1 // pred_region
      _
    $region13: #{tpu_custom_call.1} parent=1 // pred_fallthru
      _
    // Predicated region
    $region14: #{tpu_custom_call.1} parent=1 // pred_check
      _
    $region15: #{tpu_custom_call.1} parent=1 // pred_check_branch
      %43 = sbr.rel (0) target = $region17
    $region16: #{tpu_custom_call.1} parent=1 // pred_region
      %s45 = ssub.s32 2048, 2048
      %46 = vsyncadd [#allocation6], %s45
      %s47 = sshll.u32 [#allocation7], 4
      %s48 = int_to_ptr.vmem [resolvable:$true] %s47
      %53 = dma.hbm_to_vmem [thread:$0]  %s3, 2048, %s48, [#allocation6], 128, 128, 8
    $region17: #{tpu_custom_call.1} parent=1 // pred_fallthru
      _
    // Predicated region
    $region18: #{tpu_custom_call.1} parent=1 // pred_check
      _
    $region19: #{tpu_custom_call.1} parent=1 // pred_check_branch
      %55 = sbr.rel (0) target = $region21
    $region20: #{tpu_custom_call.1} parent=1 // pred_region
      _
    $region21: #{tpu_custom_call.1} parent=1 // pred_fallthru
      _
    // Predicated region
    $region22: #{tpu_custom_call.1} parent=1 // pred_check
      _
    $region23: #{tpu_custom_call.1} parent=1 // pred_check_branch
      %57 = sbr.rel (0) target = $region25
    $region24: #{tpu_custom_call.1} parent=1 // pred_region
      %s59 = ssub.s32 2048, 2048
      %60 = vsyncadd [#allocation9], %s59
      %s61 = sshll.u32 [#allocation8], 4
      %s62 = int_to_ptr.vmem [resolvable:$true] %s61
      %67 = dma.hbm_to_vmem [thread:$0]  %s5, 2048, %s62, [#allocation9], 128, 128, 8
    $region25: #{tpu_custom_call.1} parent=1 // pred_fallthru
      _
    // Predicated region
    $region26: #{tpu_custom_call.1} parent=1 // pred_check
      _
    $region27: #{tpu_custom_call.1} parent=1 // pred_check_branch
      %69 = sbr.rel (0) target = $region29
    $region28: #{tpu_custom_call.1} parent=1 // pred_region
      _
    $region29: #{tpu_custom_call.1} parent=1 // pred_fallthru
      _
    // Predicated region
    $region30: #{tpu_custom_call.1} parent=1 // pred_check
      _
    $region31: #{tpu_custom_call.1} parent=1 // pred_check_branch
      %71 = sbr.rel (0) target = $region33
    $region32: #{tpu_custom_call.1} parent=1 // pred_region
      %s73 = ssub.s32 2048, 2048
      %74 = vsyncadd [#allocation9], %s73
      %s75 = sshll.u32 [#allocation10], 4
      %s76 = int_to_ptr.vmem [resolvable:$true] %s75
      %81 = dma.hbm_to_vmem [thread:$0]  %s7, 2048, %s76, [#allocation9], 128, 128, 8
    $region33: #{tpu_custom_call.1} parent=1 // pred_fallthru
      _
    // Predicated region
    $region34: #{tpu_custom_call.1} parent=1 // pred_check
      _
    $region35: #{tpu_custom_call.1} parent=1 // pred_check_branch
      %83 = sbr.rel (0) target = $region37
    $region36: #{tpu_custom_call.1} parent=1 // pred_region
      _
    $region37: #{tpu_custom_call.1} parent=1 // pred_fallthru
      _
    // Predicated region
    $region38: #{tpu_custom_call.1} parent=1 // pred_check
      _
    $region39: #{tpu_custom_call.1} parent=1 // pred_check_branch
      %85 = sbr.rel (0) target = $region41
    $region40: #{tpu_custom_call.1} parent=1 // pred_region
      %86 = dma.done [#allocation3], 128
    $region41: #{tpu_custom_call.1} parent=1 // pred_fallthru
      _
    // Predicated region
    $region42: #{tpu_custom_call.1} parent=1 // pred_check
      _
    $region43: #{tpu_custom_call.1} parent=1 // pred_check_branch
      %88 = sbr.rel (0) target = $region45
    $region44: #{tpu_custom_call.1} parent=1 // pred_region
      %89 = dma.done [#allocation6], 2048
    $region45: #{tpu_custom_call.1} parent=1 // pred_fallthru
      _
    // Predicated region
    $region46: #{tpu_custom_call.1} parent=1 // pred_check
      _
    $region47: #{tpu_custom_call.1} parent=1 // pred_check_branch
      %91 = sbr.rel (0) target = $region49
    $region48: #{tpu_custom_call.1} parent=1 // pred_region
      %92 = dma.done [#allocation6], 2048
    $region49: #{tpu_custom_call.1} parent=1 // pred_fallthru
      _
    // Predicated region
    $region50: #{tpu_custom_call.1} parent=1 // pred_check
      _
    $region51: #{tpu_custom_call.1} parent=1 // pred_check_branch
      %94 = sbr.rel (0) target = $region53
    $region52: #{tpu_custom_call.1} parent=1 // pred_region
      %95 = dma.done [#allocation9], 2048
    $region53: #{tpu_custom_call.1} parent=1 // pred_fallthru
      _
    // Predicated region
    $region54: #{tpu_custom_call.1} parent=1 // pred_check
      _
    $region55: #{tpu_custom_call.1} parent=1 // pred_check_branch
      %97 = sbr.rel (0) target = $region57
    $region56: #{tpu_custom_call.1} parent=1 // pred_region
      %98 = dma.done [#allocation9], 2048
    $region57: #{tpu_custom_call.1} parent=1 // pred_fallthru
      _
    %v99 = vld [vmem:[#allocation2] sm:$0xff]
    %v100 = vld [vmem:[#allocation5] sm:$0xff]
    %v101 = vld [vmem:[#allocation5 + $0x8] sm:$0xff]
    %v102 = vld [vmem:[#allocation5 + $0x10] sm:$0xff]
    %v103 = vld [vmem:[#allocation5 + $0x18] sm:$0xff]
    %v104 = vld [vmem:[#allocation5 + $0x20] sm:$0xff]
    %v105 = vld [vmem:[#allocation5 + $0x28] sm:$0xff]
    %v106 = vld [vmem:[#allocation5 + $0x30] sm:$0xff]
    %v107 = vld [vmem:[#allocation5 + $0x38] sm:$0xff]
    %v108 = vld [vmem:[#allocation5 + $0x40] sm:$0xff]
    %v109 = vld [vmem:[#allocation5 + $0x48] sm:$0xff]
    %v110 = vld [vmem:[#allocation5 + $0x50] sm:$0xff]
    %v111 = vld [vmem:[#allocation5 + $0x58] sm:$0xff]
    %v112 = vld [vmem:[#allocation5 + $0x60] sm:$0xff]
    %v113 = vld [vmem:[#allocation5 + $0x68] sm:$0xff]
    %v114 = vld [vmem:[#allocation5 + $0x70] sm:$0xff]
    %v115 = vld [vmem:[#allocation5 + $0x78] sm:$0xff]
    %v116 = vld [vmem:[%s2] sm:$0x1]
    %v118 = vlaneseq
    %v119 = vshrl.u32 %v118, 7
    %v120 = vsub.s32 0, %v119
    %v121 = vrot.slane %v116, %v120
    %123 = vmatprep.subr.mxu0 0.0
    %124 = vmatpush1.msra.mxu0 %v100
    %125 = vmatprep.subr.mxu0 0.0
    %126 = vmatpush1.msra.mxu0 %v101
    %127 = vmatprep.subr.mxu0 0.0
    %128 = vmatpush1.msra.mxu0 %v102
    %129 = vmatprep.subr.mxu0 0.0
    %130 = vmatpush1.msra.mxu0 %v103
    %131 = vmatprep.subr.mxu0 0.0
    %132 = vmatpush1.msra.mxu0 %v104
    %133 = vmatprep.subr.mxu0 0.0
    %134 = vmatpush1.msra.mxu0 %v105
    %135 = vmatprep.subr.mxu0 0.0
    %136 = vmatpush1.msra.mxu0 %v106
    %137 = vmatprep.subr.mxu0 0.0
    %138 = vmatpush1.msra.mxu0 %v107
    %139 = vmatprep.subr.mxu0 0.0
    %140 = vmatpush1.msra.mxu0 %v108
    %141 = vmatprep.subr.mxu0 0.0
    %142 = vmatpush1.msra.mxu0 %v109
    %143 = vmatprep.subr.mxu0 0.0
    %144 = vmatpush1.msra.mxu0 %v110
    %145 = vmatprep.subr.mxu0 0.0
    %146 = vmatpush1.msra.mxu0 %v111
    %147 = vmatprep.subr.mxu0 0.0
    %148 = vmatpush1.msra.mxu0 %v112
    %149 = vmatprep.subr.mxu0 0.0
    %150 = vmatpush1.msra.mxu0 %v113
    %151 = vmatprep.subr.mxu0 0.0
    %152 = vmatpush1.msra.mxu0 %v114
    %153 = vmatprep.subr.mxu0 0.0
    %154 = vmatpush1.msra.mxu0 %v115
    %155 = vmatprep.subr.mxu0 0.0
    %156 = vmatpush1.msra.mxu0 0.0
    %157 = vmatprep.subr.mxu0 0.0
    %158 = vmatpush1.msra.mxu0 0.0
    %159 = vmatprep.subr.mxu0 0.0
    %160 = vmatpush1.msra.mxu0 0.0
    %161 = vmatprep.subr.mxu0 0.0
    %162 = vmatpush1.msra.mxu0 0.0
    %163 = vmatprep.subr.mxu0 0.0
    %164 = vmatpush1.msra.mxu0 0.0
    %165 = vmatprep.subr.mxu0 0.0
    %166 = vmatpush1.msra.mxu0 0.0
    %167 = vmatprep.subr.mxu0 0.0
    %168 = vmatpush1.msra.mxu0 0.0
    %169 = vmatprep.subr.mxu0 0.0
    %170 = vmatpush1.msra.mxu0 0.0
    %171 = vmatprep.subr.mxu0 0.0
    %172 = vmatpush1.msra.mxu0 0.0
    %173 = vmatprep.subr.mxu0 0.0
    %174 = vmatpush1.msra.mxu0 0.0
    %175 = vmatprep.subr.mxu0 0.0
    %176 = vmatpush1.msra.mxu0 0.0
    %177 = vmatprep.subr.mxu0 0.0
    %178 = vmatpush1.msra.mxu0 0.0
    %179 = vmatprep.subr.mxu0 0.0
    %180 = vmatpush1.msra.mxu0 0.0
    %181 = vmatprep.subr.mxu0 0.0
    %182 = vmatpush1.msra.mxu0 0.0
    %183 = vmatprep.subr.mxu0 0.0
    %184 = vmatpush1.msra.mxu0 0.0
    %185 = vmatprep.subr.mxu0 0.0
    %186 = vmatpush1.msra.mxu0 0.0
    %187 = vmatprep.mubr.f32.mxu0 0.0
    %188 = vmatmul.mubr.f32.gmra.mrb[0].mxu0 %v99
    %v189 = vpop.f32.mrb[0].mxu0
    %v190 = vadd.f32 %v121, %v189
    %v191 = vpop.f32.mrb[0].mxu0
    %192 = vdwg.mxu0
    %v193 = vxor.u32 %v190, 2147483648
    %v194 = vmul.f32 %v193, 1.442695
    %v195 = vpow.pop %v194
    %v196 = vadd.f32 %v195, 1.0
    %v197 = vrcp.pop %v196
    %v198 = vmul.f32 1.0, %v197
    %v199 = vld [vmem:[#allocation7] sm:$0xff]
    %v200 = vld [vmem:[#allocation7 + $0x8] sm:$0xff]
    %v201 = vld [vmem:[#allocation7 + $0x10] sm:$0xff]
    %v202 = vld [vmem:[#allocation7 + $0x18] sm:$0xff]
    %v203 = vld [vmem:[#allocation7 + $0x20] sm:$0xff]
    %v204 = vld [vmem:[#allocation7 + $0x28] sm:$0xff]
    %v205 = vld [vmem:[#allocation7 + $0x30] sm:$0xff]
    %v206 = vld [vmem:[#allocation7 + $0x38] sm:$0xff]
    %v207 = vld [vmem:[#allocation7 + $0x40] sm:$0xff]
    %v208 = vld [vmem:[#allocation7 + $0x48] sm:$0xff]
    %v209 = vld [vmem:[#allocation7 + $0x50] sm:$0xff]
    %v210 = vld [vmem:[#allocation7 + $0x58] sm:$0xff]
    %v211 = vld [vmem:[#allocation7 + $0x60] sm:$0xff]
    %v212 = vld [vmem:[#allocation7 + $0x68] sm:$0xff]
    %v213 = vld [vmem:[#allocation7 + $0x70] sm:$0xff]
    %v214 = vld [vmem:[#allocation7 + $0x78] sm:$0xff]
    %v215 = vld [vmem:[%s4] sm:$0x1]
    %v217 = vlaneseq
    %v218 = vshrl.u32 %v217, 7
    %v219 = vsub.s32 0, %v218
    %v220 = vrot.slane %v215, %v219
    %222 = vmatprep.subr.mxu0 0.0
    %223 = vmatpush1.msra.mxu0 %v199
    %224 = vmatprep.subr.mxu0 0.0
    %225 = vmatpush1.msra.mxu0 %v200
    %226 = vmatprep.subr.mxu0 0.0
    %227 = vmatpush1.msra.mxu0 %v201
    %228 = vmatprep.subr.mxu0 0.0
    %229 = vmatpush1.msra.mxu0 %v202
    %230 = vmatprep.subr.mxu0 0.0
    %231 = vmatpush1.msra.mxu0 %v203
    %232 = vmatprep.subr.mxu0 0.0
    %233 = vmatpush1.msra.mxu0 %v204
    %234 = vmatprep.subr.mxu0 0.0
    %235 = vmatpush1.msra.mxu0 %v205
    %236 = vmatprep.subr.mxu0 0.0
    %237 = vmatpush1.msra.mxu0 %v206
    %238 = vmatprep.subr.mxu0 0.0
    %239 = vmatpush1.msra.mxu0 %v207
    %240 = vmatprep.subr.mxu0 0.0
    %241 = vmatpush1.msra.mxu0 %v208
    %242 = vmatprep.subr.mxu0 0.0
    %243 = vmatpush1.msra.mxu0 %v209
    %244 = vmatprep.subr.mxu0 0.0
    %245 = vmatpush1.msra.mxu0 %v210
    %246 = vmatprep.subr.mxu0 0.0
    %247 = vmatpush1.msra.mxu0 %v211
    %248 = vmatprep.subr.mxu0 0.0
    %249 = vmatpush1.msra.mxu0 %v212
    %250 = vmatprep.subr.mxu0 0.0
    %251 = vmatpush1.msra.mxu0 %v213
    %252 = vmatprep.subr.mxu0 0.0
    %253 = vmatpush1.msra.mxu0 %v214
    %254 = vmatprep.subr.mxu0 0.0
    %255 = vmatpush1.msra.mxu0 0.0
    %256 = vmatprep.subr.mxu0 0.0
    %257 = vmatpush1.msra.mxu0 0.0
    %258 = vmatprep.subr.mxu0 0.0
    %259 = vmatpush1.msra.mxu0 0.0
    %260 = vmatprep.subr.mxu0 0.0
    %261 = vmatpush1.msra.mxu0 0.0
    %262 = vmatprep.subr.mxu0 0.0
    %263 = vmatpush1.msra.mxu0 0.0
    %264 = vmatprep.subr.mxu0 0.0
    %265 = vmatpush1.msra.mxu0 0.0
    %266 = vmatprep.subr.mxu0 0.0
    %267 = vmatpush1.msra.mxu0 0.0
    %268 = vmatprep.subr.mxu0 0.0
    %269 = vmatpush1.msra.mxu0 0.0
    %270 = vmatprep.subr.mxu0 0.0
    %271 = vmatpush1.msra.mxu0 0.0
    %272 = vmatprep.subr.mxu0 0.0
    %273 = vmatpush1.msra.mxu0 0.0
    %274 = vmatprep.subr.mxu0 0.0
    %275 = vmatpush1.msra.mxu0 0.0
    %276 = vmatprep.subr.mxu0 0.0
    %277 = vmatpush1.msra.mxu0 0.0
    %278 = vmatprep.subr.mxu0 0.0
    %279 = vmatpush1.msra.mxu0 0.0
    %280 = vmatprep.subr.mxu0 0.0
    %281 = vmatpush1.msra.mxu0 0.0
    %282 = vmatprep.subr.mxu0 0.0
    %283 = vmatpush1.msra.mxu0 0.0
    %284 = vmatprep.subr.mxu0 0.0
    %285 = vmatpush1.msra.mxu0 0.0
    %286 = vmatprep.mubr.f32.mxu0 0.0
    %287 = vmatmul.mubr.f32.gmra.mrb[0].mxu0 %v198
    %v288 = vpop.f32.mrb[0].mxu0
    %v289 = vadd.f32 %v220, %v288
    %v290 = vpop.f32.mrb[0].mxu0
    %291 = vdwg.mxu0
    %v292 = vxor.u32 %v289, 2147483648
    %v293 = vmul.f32 %v292, 1.442695
    %v294 = vpow.pop %v293
    %v295 = vadd.f32 %v294, 1.0
    %v296 = vrcp.pop %v295
    %v297 = vmul.f32 1.0, %v296
    %v298 = vld [vmem:[#allocation8] sm:$0xff]
    %v299 = vld [vmem:[#allocation8 + $0x8] sm:$0xff]
    %v300 = vld [vmem:[#allocation8 + $0x10] sm:$0xff]
    %v301 = vld [vmem:[#allocation8 + $0x18] sm:$0xff]
    %v302 = vld [vmem:[#allocation8 + $0x20] sm:$0xff]
    %v303 = vld [vmem:[#allocation8 + $0x28] sm:$0xff]
    %v304 = vld [vmem:[#allocation8 + $0x30] sm:$0xff]
    %v305 = vld [vmem:[#allocation8 + $0x38] sm:$0xff]
    %v306 = vld [vmem:[#allocation8 + $0x40] sm:$0xff]
    %v307 = vld [vmem:[#allocation8 + $0x48] sm:$0xff]
    %v308 = vld [vmem:[#allocation8 + $0x50] sm:$0xff]
    %v309 = vld [vmem:[#allocation8 + $0x58] sm:$0xff]
    %v310 = vld [vmem:[#allocation8 + $0x60] sm:$0xff]
    %v311 = vld [vmem:[#allocation8 + $0x68] sm:$0xff]
    %v312 = vld [vmem:[#allocation8 + $0x70] sm:$0xff]
    %v313 = vld [vmem:[#allocation8 + $0x78] sm:$0xff]
    %v314 = vld [vmem:[%s6] sm:$0x1]
    %v316 = vlaneseq
    %v317 = vshrl.u32 %v316, 7
    %v318 = vsub.s32 0, %v317
    %v319 = vrot.slane %v314, %v318
    %321 = vmatprep.subr.mxu0 0.0
    %322 = vmatpush1.msra.mxu0 %v298
    %323 = vmatprep.subr.mxu0 0.0
    %324 = vmatpush1.msra.mxu0 %v299
    %325 = vmatprep.subr.mxu0 0.0
    %326 = vmatpush1.msra.mxu0 %v300
    %327 = vmatprep.subr.mxu0 0.0
    %328 = vmatpush1.msra.mxu0 %v301
    %329 = vmatprep.subr.mxu0 0.0
    %330 = vmatpush1.msra.mxu0 %v302
    %331 = vmatprep.subr.mxu0 0.0
    %332 = vmatpush1.msra.mxu0 %v303
    %333 = vmatprep.subr.mxu0 0.0
    %334 = vmatpush1.msra.mxu0 %v304
    %335 = vmatprep.subr.mxu0 0.0
    %336 = vmatpush1.msra.mxu0 %v305
    %337 = vmatprep.subr.mxu0 0.0
    %338 = vmatpush1.msra.mxu0 %v306
    %339 = vmatprep.subr.mxu0 0.0
    %340 = vmatpush1.msra.mxu0 %v307
    %341 = vmatprep.subr.mxu0 0.0
    %342 = vmatpush1.msra.mxu0 %v308
    %343 = vmatprep.subr.mxu0 0.0
    %344 = vmatpush1.msra.mxu0 %v309
    %345 = vmatprep.subr.mxu0 0.0
    %346 = vmatpush1.msra.mxu0 %v310
    %347 = vmatprep.subr.mxu0 0.0
    %348 = vmatpush1.msra.mxu0 %v311
    %349 = vmatprep.subr.mxu0 0.0
    %350 = vmatpush1.msra.mxu0 %v312
    %351 = vmatprep.subr.mxu0 0.0
    %352 = vmatpush1.msra.mxu0 %v313
    %353 = vmatprep.subr.mxu0 0.0
    %354 = vmatpush1.msra.mxu0 0.0
    %355 = vmatprep.subr.mxu0 0.0
    %356 = vmatpush1.msra.mxu0 0.0
    %357 = vmatprep.subr.mxu0 0.0
    %358 = vmatpush1.msra.mxu0 0.0
    %359 = vmatprep.subr.mxu0 0.0
    %360 = vmatpush1.msra.mxu0 0.0
    %361 = vmatprep.subr.mxu0 0.0
    %362 = vmatpush1.msra.mxu0 0.0
    %363 = vmatprep.subr.mxu0 0.0
    %364 = vmatpush1.msra.mxu0 0.0
    %365 = vmatprep.subr.mxu0 0.0
    %366 = vmatpush1.msra.mxu0 0.0
    %367 = vmatprep.subr.mxu0 0.0
    %368 = vmatpush1.msra.mxu0 0.0
    %369 = vmatprep.subr.mxu0 0.0
    %370 = vmatpush1.msra.mxu0 0.0
    %371 = vmatprep.subr.mxu0 0.0
    %372 = vmatpush1.msra.mxu0 0.0
    %373 = vmatprep.subr.mxu0 0.0
    %374 = vmatpush1.msra.mxu0 0.0
    %375 = vmatprep.subr.mxu0 0.0
    %376 = vmatpush1.msra.mxu0 0.0
    %377 = vmatprep.subr.mxu0 0.0
    %378 = vmatpush1.msra.mxu0 0.0
    %379 = vmatprep.subr.mxu0 0.0
    %380 = vmatpush1.msra.mxu0 0.0
    %381 = vmatprep.subr.mxu0 0.0
    %382 = vmatpush1.msra.mxu0 0.0
    %383 = vmatprep.subr.mxu0 0.0
    %384 = vmatpush1.msra.mxu0 0.0
    %385 = vmatprep.mubr.f32.mxu0 0.0
    %386 = vmatmul.mubr.f32.gmra.mrb[0].mxu0 %v297
    %v387 = vpop.f32.mrb[0].mxu0
    %v388 = vadd.f32 %v319, %v387
    %v389 = vpop.f32.mrb[0].mxu0
    %390 = vdwg.mxu0
    %v391 = vxor.u32 %v388, 2147483648
    %v392 = vmul.f32 %v391, 1.442695
    %v393 = vpow.pop %v392
    %v394 = vadd.f32 %v393, 1.0
    %v395 = vrcp.pop %v394
    %v396 = vmul.f32 1.0, %v395
    %v397 = vld [vmem:[#allocation10] sm:$0xff]
    %v398 = vld [vmem:[#allocation10 + $0x8] sm:$0xff]
    %v399 = vld [vmem:[#allocation10 + $0x10] sm:$0xff]
    %v400 = vld [vmem:[#allocation10 + $0x18] sm:$0xff]
    %v401 = vld [vmem:[#allocation10 + $0x20] sm:$0xff]
    %v402 = vld [vmem:[#allocation10 + $0x28] sm:$0xff]
    %v403 = vld [vmem:[#allocation10 + $0x30] sm:$0xff]
    %v404 = vld [vmem:[#allocation10 + $0x38] sm:$0xff]
    %v405 = vld [vmem:[#allocation10 + $0x40] sm:$0xff]
    %v406 = vld [vmem:[#allocation10 + $0x48] sm:$0xff]
    %v407 = vld [vmem:[#allocation10 + $0x50] sm:$0xff]
    %v408 = vld [vmem:[#allocation10 + $0x58] sm:$0xff]
    %v409 = vld [vmem:[#allocation10 + $0x60] sm:$0xff]
    %v410 = vld [vmem:[#allocation10 + $0x68] sm:$0xff]
    %v411 = vld [vmem:[#allocation10 + $0x70] sm:$0xff]
    %v412 = vld [vmem:[#allocation10 + $0x78] sm:$0xff]
    %v413 = vld [vmem:[%s8] sm:$0x1]
    %v415 = vlaneseq
    %v416 = vshrl.u32 %v415, 7
    %v417 = vsub.s32 0, %v416
    %v418 = vrot.slane %v413, %v417
    %420 = vmatprep.subr.mxu0 0.0
    %421 = vmatpush1.msra.mxu0 %v397
    %422 = vmatprep.subr.mxu0 0.0
    %423 = vmatpush1.msra.mxu0 %v398
    %424 = vmatprep.subr.mxu0 0.0
    %425 = vmatpush1.msra.mxu0 %v399
    %426 = vmatprep.subr.mxu0 0.0
    %427 = vmatpush1.msra.mxu0 %v400
    %428 = vmatprep.subr.mxu0 0.0
    %429 = vmatpush1.msra.mxu0 %v401
    %430 = vmatprep.subr.mxu0 0.0
    %431 = vmatpush1.msra.mxu0 %v402
    %432 = vmatprep.subr.mxu0 0.0
    %433 = vmatpush1.msra.mxu0 %v403
    %434 = vmatprep.subr.mxu0 0.0
    %435 = vmatpush1.msra.mxu0 %v404
    %436 = vmatprep.subr.mxu0 0.0
    %437 = vmatpush1.msra.mxu0 %v405
    %438 = vmatprep.subr.mxu0 0.0
    %439 = vmatpush1.msra.mxu0 %v406
    %440 = vmatprep.subr.mxu0 0.0
    %441 = vmatpush1.msra.mxu0 %v407
    %442 = vmatprep.subr.mxu0 0.0
    %443 = vmatpush1.msra.mxu0 %v408
    %444 = vmatprep.subr.mxu0 0.0
    %445 = vmatpush1.msra.mxu0 %v409
    %446 = vmatprep.subr.mxu0 0.0
    %447 = vmatpush1.msra.mxu0 %v410
    %448 = vmatprep.subr.mxu0 0.0
    %449 = vmatpush1.msra.mxu0 %v411
    %450 = vmatprep.subr.mxu0 0.0
    %451 = vmatpush1.msra.mxu0 %v412
    %452 = vmatprep.subr.mxu0 0.0
    %453 = vmatpush1.msra.mxu0 0.0
    %454 = vmatprep.subr.mxu0 0.0
    %455 = vmatpush1.msra.mxu0 0.0
    %456 = vmatprep.subr.mxu0 0.0
    %457 = vmatpush1.msra.mxu0 0.0
    %458 = vmatprep.subr.mxu0 0.0
    %459 = vmatpush1.msra.mxu0 0.0
    %460 = vmatprep.subr.mxu0 0.0
    %461 = vmatpush1.msra.mxu0 0.0
    %462 = vmatprep.subr.mxu0 0.0
    %463 = vmatpush1.msra.mxu0 0.0
    %464 = vmatprep.subr.mxu0 0.0
    %465 = vmatpush1.msra.mxu0 0.0
    %466 = vmatprep.subr.mxu0 0.0
    %467 = vmatpush1.msra.mxu0 0.0
    %468 = vmatprep.subr.mxu0 0.0
    %469 = vmatpush1.msra.mxu0 0.0
    %470 = vmatprep.subr.mxu0 0.0
    %471 = vmatpush1.msra.mxu0 0.0
    %472 = vmatprep.subr.mxu0 0.0
    %473 = vmatpush1.msra.mxu0 0.0
    %474 = vmatprep.subr.mxu0 0.0
    %475 = vmatpush1.msra.mxu0 0.0
    %476 = vmatprep.subr.mxu0 0.0
    %477 = vmatpush1.msra.mxu0 0.0
    %478 = vmatprep.subr.mxu0 0.0
    %479 = vmatpush1.msra.mxu0 0.0
    %480 = vmatprep.subr.mxu0 0.0
    %481 = vmatpush1.msra.mxu0 0.0
    %482 = vmatprep.subr.mxu0 0.0
    %483 = vmatpush1.msra.mxu0 0.0
    %484 = vmatprep.mubr.f32.mxu0 0.0
    %485 = vmatmul.mubr.f32.gmra.mrb[0].mxu0 %v396
    %v486 = vpop.f32.mrb[0].mxu0
    %v487 = vadd.f32 %v418, %v486
    %v488 = vpop.f32.mrb[0].mxu0
    %489 = vdwg.mxu0
    %490 = vst [vmem:[#allocation11] sm:$0xff] %v487
    // Predicated region
    $region58: #{tpu_custom_call.1} parent=1 // pred_check
      _
    $region59: #{tpu_custom_call.1} parent=1 // pred_check_branch
      %492 = sbr.rel (0) target = $region61
    $region60: #{tpu_custom_call.1} parent=1 // pred_region
      %s494 = ssub.s32 128, 128
      %495 = vsyncadd [#allocation4], %s494
      %s497 = sshll.u32 [#allocation11], 4
      %s498 = int_to_ptr.vmem [resolvable:$true] %s497
      %500 = dma.vmem_to_hbm [thread:$0]  %s498, 128, %s9, [#allocation4]
    $region61: #{tpu_custom_call.1} parent=1 // pred_fallthru
      _
    // Predicated region
    $region62: #{tpu_custom_call.1} parent=1 // pred_check
      _
    $region63: #{tpu_custom_call.1} parent=1 // pred_check_branch
      %502 = sbr.rel (0) target = $region65
    $region64: #{tpu_custom_call.1} parent=1 // pred_region
      %503 = dma.done [#allocation4], 128
    $region65: #{tpu_custom_call.1} parent=1 // pred_fallthru
      _
    %504 = vsyncpa [#allocation3], 1
    %505 = vsyncpa [#allocation6], 1
    %506 = vsyncpa [#allocation9], 1
    %507 = vsyncpa [#allocation4], 1

</llo_original>
